<compile_context>
chip_gen: v7x
topology: tpu7x:2x2x1
jax: 0.10.0
libtpu: 0.0.40
codegen_flags: <defaults>
</compile_context>

<pallas_src>
import functools

import jax
import jax.numpy as jnp
from jax.experimental import pallas as pl
from jax.experimental.pallas import tpu as pltpu

IN_FEATURES = 784
K_PAD = 896          # 784 rounded up to a multiple of 128 (lane-dense K)
HIDDEN = 256
OUT_FEATURES = 10
OUT_PAD = 128        # lane-dense output (unmasked vst), sliced to 10 outside


def _round_up(x, m):
    return ((x + m - 1) // m) * m


def mlp_kernel(x_ref, w1_ref, b1_ref, w2_ref, b2_ref, o_ref):
    # x_ref:  (TB, 896)  bf16     w1_ref: (896, 256) bf16   b1_ref: (1, 256) f32
    # w2_ref: (256, 128) bf16     b2_ref: (1, 128)   f32    o_ref:  (TB, 128) f32
    h = jnp.dot(x_ref[...], w1_ref[...], preferred_element_type=jnp.float32)
    h = jnp.maximum(h + b1_ref[...], 0.0)        # f32 epilogue on the VPU
    h_bf16 = h.astype(jnp.bfloat16)              # deliberate precision-loss point (MXU input)
    out = jnp.dot(h_bf16, w2_ref[...], preferred_element_type=jnp.float32)
    o_ref[...] = out + b2_ref[...]


def prepare_params(w1, b1, w2, b2):
    """One-time padding + bf16 cast of the weights (done outside the kernel)."""
    w1_p = jnp.zeros((K_PAD, HIDDEN), jnp.bfloat16).at[:IN_FEATURES, :].set(
        w1.astype(jnp.bfloat16))
    b1_p = b1.reshape(1, HIDDEN).astype(jnp.float32)
    w2_p = jnp.zeros((HIDDEN, OUT_PAD), jnp.bfloat16).at[:, :OUT_FEATURES].set(
        w2.astype(jnp.bfloat16))
    b2_p = jnp.zeros((1, OUT_PAD), jnp.float32).at[:, :OUT_FEATURES].set(
        b2.reshape(1, OUT_FEATURES).astype(jnp.float32))
    return w1_p, b1_p, w2_p, b2_p


@jax.jit
def mlp_forward(x_nchw, w1_p, b1_p, w2_p, b2_p):
    B = x_nchw.shape[0]
    x_flat = x_nchw.reshape(B, -1)                       # nn.Flatten -> (B, 784)

    # Batch tile: 256 matches the v6e/v7x MXU M side; small batches just round
    # up to a sublane multiple (8) so the demo does no wasted work.
    TB = 256 if B >= 256 else _round_up(B, 8)
    B_pad = _round_up(B, TB)

    # bf16 + zero-pad batch and K to lane-dense sizes.
    x_p = jnp.zeros((B_pad, K_PAD), jnp.bfloat16)
    x_p = x_p.at[:B, :IN_FEATURES].set(x_flat.astype(jnp.bfloat16))

    grid = (B_pad // TB,)

    bytes_accessed = (
        x_p.size * 2 + w1_p.size * 2 + w2_p.size * 2     # bf16 inputs
        + b1_p.size * 4 + b2_p.size * 4                  # f32 biases
        + B_pad * OUT_PAD * 4                            # f32 output
    )
    cost = pl.CostEstimate(
        flops=2 * B_pad * K_PAD * HIDDEN + 2 * B_pad * HIDDEN * OUT_PAD,
        transcendentals=0,
        bytes_accessed=bytes_accessed,
    )

    out = pl.pallas_call(
        mlp_kernel,
        out_shape=jax.ShapeDtypeStruct((B_pad, OUT_PAD), jnp.float32),
        grid=grid,
        in_specs=[
            pl.BlockSpec((TB, K_PAD), lambda i: (i, 0)),        # x tile (pipelined)
            pl.BlockSpec((K_PAD, HIDDEN), lambda i: (0, 0)),    # w1 (resident)
            pl.BlockSpec((1, HIDDEN), lambda i: (0, 0)),        # b1 (resident)
            pl.BlockSpec((HIDDEN, OUT_PAD), lambda i: (0, 0)),  # w2 (resident)
            pl.BlockSpec((1, OUT_PAD), lambda i: (0, 0)),       # b2 (resident)
        ],
        out_specs=pl.BlockSpec((TB, OUT_PAD), lambda i: (i, 0)),
        compiler_params=pltpu.CompilerParams(
            dimension_semantics=("parallel",)),
        cost_estimate=cost,
    )(x_p, w1_p, b1_p, w2_p, b2_p)

    return out[:B, :OUT_FEATURES]


def init_params(key):
    # Mimic PyTorch nn.Linear default init: U(-1/sqrt(fan_in), 1/sqrt(fan_in)).
    k1, k2, k3, k4 = jax.random.split(key, 4)
    bound1 = 1.0 / jnp.sqrt(784.0)
    bound2 = 1.0 / jnp.sqrt(256.0)
    w1 = jax.random.uniform(k1, (IN_FEATURES, HIDDEN), jnp.float32, -bound1, bound1)
    b1 = jax.random.uniform(k2, (HIDDEN,), jnp.float32, -bound1, bound1)
    w2 = jax.random.uniform(k3, (HIDDEN, OUT_FEATURES), jnp.float32, -bound2, bound2)
    b2 = jax.random.uniform(k4, (OUT_FEATURES,), jnp.float32, -bound2, bound2)
    return w1, b1, w2, b2


if __name__ == "__main__":
    key = jax.random.PRNGKey(0)
    kx, kp = jax.random.split(key)

    # Small batch, MNIST-like NCHW input (B, 1, 28, 28) -> flatten to 784.
    B = 8
    x = jax.random.normal(kx, (B, 1, 28, 28), jnp.float32)
    w1, b1, w2, b2 = init_params(kp)
    w1_p, b1_p, w2_p, b2_p = prepare_params(w1, b1, w2, b2)

    out = mlp_forward(x, w1_p, b1_p, w2_p, b2_p)
    out = jax.block_until_ready(out)

    # Reference check in plain JAX (f32; bf16 matmuls -> relaxed tolerance).
    x_flat = x.reshape(B, -1)
    ref = jnp.maximum(x_flat @ w1 + b1, 0.0) @ w2 + b2
    assert out.shape == (B, OUT_FEATURES)
    assert jnp.allclose(out, ref, atol=3e-2, rtol=3e-2)

    print("KERNEL_OK")
</pallas_src>

<mosaic_0001>
module attributes {stable_mosaic.version = 11 : i64} {
  func.func @mlp_kernel(%arg0: i32, %arg1: memref<8x896xbf16, #tpu.memory_space<vmem>>, %arg2: memref<896x256xbf16, #tpu.memory_space<vmem>>, %arg3: memref<1x256xf32, #tpu.memory_space<vmem>>, %arg4: memref<256x128xbf16, #tpu.memory_space<vmem>>, %arg5: memref<1x128xf32, #tpu.memory_space<vmem>>, %arg6: memref<8x128xf32, #tpu.memory_space<vmem>>) attributes {dimension_semantics = [#tpu.dimension_semantics<parallel>], iteration_bounds = array<i64: 1>, scalar_prefetch = 0 : i64, scratch_operands = 0 : i64, tpu.core_type = #tpu.core_type<tc>, window_params = [{transform_indices = @transform_0, window_bounds = array<i64: 8, 896>}, {pipeline_mode = #tpu.pipeline_mode<synchronous>, transform_indices = @transform_1, window_bounds = array<i64: 896, 256>}, {pipeline_mode = #tpu.pipeline_mode<synchronous>, transform_indices = @transform_2, window_bounds = array<i64: 1, 256>}, {pipeline_mode = #tpu.pipeline_mode<synchronous>, transform_indices = @transform_3, window_bounds = array<i64: 256, 128>}, {pipeline_mode = #tpu.pipeline_mode<synchronous>, transform_indices = @transform_4, window_bounds = array<i64: 1, 128>}, {transform_indices = @transform_5, window_bounds = array<i64: 8, 128>}]} {
    %c0 = arith.constant 0 : index
    %c0_0 = arith.constant 0 : index
    %0 = vector.load %arg1[%c0, %c0_0] : memref<8x896xbf16, #tpu.memory_space<vmem>>, vector<8x896xbf16>
    %c0_1 = arith.constant 0 : index
    %c0_2 = arith.constant 0 : index
    %1 = vector.load %arg2[%c0_1, %c0_2] : memref<896x256xbf16, #tpu.memory_space<vmem>>, vector<896x256xbf16>
    %cst = arith.constant dense<0.000000e+00> : vector<8x256xf32>
    %2 = tpu.matmul %0, %1, %cst {dimension_numbers = #tpu.dot_dimension_numbers<[1], [0], [0], [1], [0, 0, 1, 1], [], []>} : vector<8x896xbf16>, vector<896x256xbf16>, vector<8x256xf32> -> vector<8x256xf32>
    %c0_3 = arith.constant 0 : index
    %c0_4 = arith.constant 0 : index
    %3 = vector.load %arg3[%c0_3, %c0_4] : memref<1x256xf32, #tpu.memory_space<vmem>>, vector<1x256xf32>
    %4 = vector.broadcast %3 : vector<1x256xf32> to vector<8x256xf32>
    %5 = arith.addf %2, %4 : vector<8x256xf32>
    %cst_5 = arith.constant 0.000000e+00 : f32
    %6 = vector.broadcast %cst_5 : f32 to vector<8x256xf32>
    %7 = arith.maximumf %5, %6 : vector<8x256xf32>
    %8 = arith.truncf %7 : vector<8x256xf32> to vector<8x256xbf16>
    %c0_6 = arith.constant 0 : index
    %c0_7 = arith.constant 0 : index
    %9 = vector.load %arg4[%c0_6, %c0_7] : memref<256x128xbf16, #tpu.memory_space<vmem>>, vector<256x128xbf16>
    %cst_8 = arith.constant dense<0.000000e+00> : vector<8x128xf32>
    %10 = tpu.matmul %8, %9, %cst_8 {dimension_numbers = #tpu.dot_dimension_numbers<[1], [0], [0], [1], [0, 0, 1, 1], [], []>} : vector<8x256xbf16>, vector<256x128xbf16>, vector<8x128xf32> -> vector<8x128xf32>
    %c0_9 = arith.constant 0 : index
    %c0_10 = arith.constant 0 : index
    %11 = vector.load %arg5[%c0_9, %c0_10] : memref<1x128xf32, #tpu.memory_space<vmem>>, vector<1x128xf32>
    %12 = vector.broadcast %11 : vector<1x128xf32> to vector<8x128xf32>
    %13 = arith.addf %10, %12 : vector<8x128xf32>
    %c0_11 = arith.constant 0 : index
    %c0_12 = arith.constant 0 : index
    %14 = vector.load %arg6[%c0_11, %c0_12] : memref<8x128xf32, #tpu.memory_space<vmem>>, vector<8x128xf32>
    tpu.vector_store %arg6[%c0_11, %c0_12], %13 {strides = array<i32>} : memref<8x128xf32, #tpu.memory_space<vmem>>, vector<8x128xf32>,
    return
  }
  func.func @transform_0(%arg0: i32) -> (i32, i32) {
    %c0_i32 = arith.constant 0 : i32
    %c0_i32_0 = arith.constant 0 : i32
    return %arg0, %c0_i32 : i32, i32
  }
  func.func @transform_1(%arg0: i32) -> (i32, i32) {
    %c0_i32 = arith.constant 0 : i32
    %c0_i32_0 = arith.constant 0 : i32
    %c0_i32_1 = arith.constant 0 : i32
    return %c0_i32, %c0_i32_0 : i32, i32
  }
  func.func @transform_2(%arg0: i32) -> (i32, i32) {
    %c0_i32 = arith.constant 0 : i32
    %c0_i32_0 = arith.constant 0 : i32
    %c0_i32_1 = arith.constant 0 : i32
    return %c0_i32, %c0_i32_0 : i32, i32
  }
  func.func @transform_3(%arg0: i32) -> (i32, i32) {
    %c0_i32 = arith.constant 0 : i32
    %c0_i32_0 = arith.constant 0 : i32
    %c0_i32_1 = arith.constant 0 : i32
    return %c0_i32, %c0_i32_0 : i32, i32
  }
  func.func @transform_4(%arg0: i32) -> (i32, i32) {
    %c0_i32 = arith.constant 0 : i32
    %c0_i32_0 = arith.constant 0 : i32
    %c0_i32_1 = arith.constant 0 : i32
    return %c0_i32, %c0_i32_0 : i32, i32
  }
  func.func @transform_5(%arg0: i32) -> (i32, i32) {
    %c0_i32 = arith.constant 0 : i32
    %c0_i32_0 = arith.constant 0 : i32
    return %arg0, %c0_i32 : i32, i32
  }
}

</mosaic_0001>

<llo_original>
// kernel: mlp_forward.1
$region0: #{mlp_forward.1}
  #allocation0 [shape = 'u32[]', space=smem, size = 0x4, offset = 0x4, fixed_abs, tag = 'smem constant byte address 0x4 - core index']
  #allocation1 [shape = 'u32[144,128]{1,0:T(1,128)}', space=vmem, size = 0x12000, scoped, tag = 'internal scratch']
  %s0 = inlined_call_operand.vmem [shape: bf16[8,896], index: 0, kind: input, shape index: {}]
  %s1 = inlined_call_operand.hbm [shape: bf16[896,256], index: 1, kind: input, shape index: {}]
  %s2 = inlined_call_operand.vmem [shape: f32[1,256], index: 2, kind: input, shape index: {}]
  %s3 = inlined_call_operand.vmem [shape: bf16[256,128], index: 3, kind: input, shape index: {}]
  %s4 = inlined_call_operand.vmem [shape: f32[1,128], index: 4, kind: input, shape index: {}]
  %s5 = inlined_call_operand.hbm [shape: f32[8,128], index: 5, kind: output, shape index: {}]
  %s6 = sld [smem:[#allocation0]]
  $region34: #{mlp_forward.1} parent=0
    _
  %s8 = ssub.s32 1, %s6
  %s9 = scalar_select 0, %s8, %s6
  $region1: #{mlp_forward.1} parent=0
    #allocation2 [shape = 'u8[458752]{0}', space=vmem, size = 0x70000, scoped, tag = 'input window, operand 1, single buffered']
    #allocation3 [shape = 's32[1]{0}', space=sflag, size = 0x4, scoped, tag = 'scoped memory for mlp_forward.1']
    #allocation4 [shape = 's32[1]{0}', space=sflag, size = 0x4, scoped, tag = 'scoped memory for mlp_forward.1']
    #allocation5 [shape = 'u8[4096]{0}', space=vmem, size = 0x1000, scoped, tag = 'output window, operand 0, single buffered']
    %10 = vsyncpa [#allocation3], 0
    %11 = vsyncpa [#allocation4], 0
    // Predicated region
    $region2: #{mlp_forward.1} parent=1 // pred_check
      _
    $region3: #{mlp_forward.1} parent=1 // pred_check_branch
      %13 = sbr.rel (0) target = $region5
    $region4: #{mlp_forward.1} parent=1 // pred_region
      _
    $region5: #{mlp_forward.1} parent=1 // pred_fallthru
      _
    // Predicated region
    $region6: #{mlp_forward.1} parent=1 // pred_check
      _
    $region7: #{mlp_forward.1} parent=1 // pred_check_branch
      %15 = sbr.rel (0) target = $region9
    $region8: #{mlp_forward.1} parent=1 // pred_region
      %s17 = ssub.s32 14336, 14336
      %18 = vsyncadd [#allocation3], %s17
      %s19 = sshll.u32 [#allocation2], 4
      %s20 = int_to_ptr.vmem [resolvable:$true] %s19
      %25 = dma.hbm_to_vmem [thread:$0]  %s1, 14336, %s20, [#allocation3], 128, 128, 8
    $region9: #{mlp_forward.1} parent=1 // pred_fallthru
      _
    // Predicated region
    $region10: #{mlp_forward.1} parent=1 // pred_check
      _
    $region11: #{mlp_forward.1} parent=1 // pred_check_branch
      %27 = sbr.rel (0) target = $region13
    $region12: #{mlp_forward.1} parent=1 // pred_region
      _
    $region13: #{mlp_forward.1} parent=1 // pred_fallthru
      _
    // Predicated region
    $region14: #{mlp_forward.1} parent=1 // pred_check
      _
    $region15: #{mlp_forward.1} parent=1 // pred_check_branch
      %29 = sbr.rel (0) target = $region17
    $region16: #{mlp_forward.1} parent=1 // pred_region
      _
    $region17: #{mlp_forward.1} parent=1 // pred_fallthru
      _
    // Predicated region
    $region18: #{mlp_forward.1} parent=1 // pred_check
      _
    $region19: #{mlp_forward.1} parent=1 // pred_check_branch
      %31 = sbr.rel (0) target = $region21
    $region20: #{mlp_forward.1} parent=1 // pred_region
      _
    $region21: #{mlp_forward.1} parent=1 // pred_fallthru
      _
    // Predicated region
    $region22: #{mlp_forward.1} parent=1 // pred_check
      _
    $region23: #{mlp_forward.1} parent=1 // pred_check_branch
      %33 = sbr.rel (0) target = $region25
    $region24: #{mlp_forward.1} parent=1 // pred_region
      %34 = dma.done [#allocation3], 14336
    $region25: #{mlp_forward.1} parent=1 // pred_fallthru
      _
    %v36 = vld [vmem:[%s0] sm:$0xff]
    %v37 = vld [vmem:[%s0 + $0x8] sm:$0xff]
    %v38 = vld [vmem:[%s0 + $0x10] sm:$0xff]
    %v39 = vld [vmem:[%s0 + $0x18] sm:$0xf]
    %v40 = vld [vmem:[#allocation2] sm:$0xff]
    %v41 = vld [vmem:[#allocation2 + $0x8] sm:$0xff]
    %v42 = vld [vmem:[#allocation2 + $0x10] sm:$0xff]
    %v43 = vld [vmem:[#allocation2 + $0x18] sm:$0xff]
    %v44 = vld [vmem:[#allocation2 + $0x20] sm:$0xff]
    %v45 = vld [vmem:[#allocation2 + $0x28] sm:$0xff]
    %v46 = vld [vmem:[#allocation2 + $0x30] sm:$0xff]
    %v47 = vld [vmem:[#allocation2 + $0x38] sm:$0xff]
    %v48 = vld [vmem:[#allocation2 + $0x40] sm:$0xff]
    %v49 = vld [vmem:[#allocation2 + $0x48] sm:$0xff]
    %v50 = vld [vmem:[#allocation2 + $0x50] sm:$0xff]
    %v51 = vld [vmem:[#allocation2 + $0x58] sm:$0xff]
    %v52 = vld [vmem:[#allocation2 + $0x60] sm:$0xff]
    %v53 = vld [vmem:[#allocation2 + $0x68] sm:$0xff]
    %v54 = vld [vmem:[#allocation2 + $0x70] sm:$0xff]
    %v55 = vld [vmem:[#allocation2 + $0x78] sm:$0xff]
    %v56 = vld [vmem:[#allocation2 + $0x80] sm:$0xff]
    %v57 = vld [vmem:[#allocation2 + $0x88] sm:$0xff]
    %v58 = vld [vmem:[#allocation2 + $0x90] sm:$0xff]
    %v59 = vld [vmem:[#allocation2 + $0x98] sm:$0xff]
    %v60 = vld [vmem:[#allocation2 + $0xa0] sm:$0xff]
    %v61 = vld [vmem:[#allocation2 + $0xa8] sm:$0xff]
    %v62 = vld [vmem:[#allocation2 + $0xb0] sm:$0xff]
    %v63 = vld [vmem:[#allocation2 + $0xb8] sm:$0xff]
    %v64 = vld [vmem:[#allocation2 + $0xc0] sm:$0xff]
    %v65 = vld [vmem:[#allocation2 + $0xc8] sm:$0xff]
    %v66 = vld [vmem:[#allocation2 + $0xd0] sm:$0xff]
    %v67 = vld [vmem:[#allocation2 + $0xd8] sm:$0xff]
    %v68 = vld [vmem:[#allocation2 + $0xe0] sm:$0xff]
    %v69 = vld [vmem:[#allocation2 + $0xe8] sm:$0xff]
    %v70 = vld [vmem:[#allocation2 + $0xf0] sm:$0xff]
    %v71 = vld [vmem:[#allocation2 + $0xf8] sm:$0xff]
    %v72 = vld [vmem:[#allocation2 + $0x100] sm:$0xff]
    %v73 = vld [vmem:[#allocation2 + $0x108] sm:$0xff]
    %v74 = vld [vmem:[#allocation2 + $0x110] sm:$0xff]
    %v75 = vld [vmem:[#allocation2 + $0x118] sm:$0xff]
    %v76 = vld [vmem:[#allocation2 + $0x120] sm:$0xff]
    %v77 = vld [vmem:[#allocation2 + $0x128] sm:$0xff]
    %v78 = vld [vmem:[#allocation2 + $0x130] sm:$0xff]
    %v79 = vld [vmem:[#allocation2 + $0x138] sm:$0xff]
    %v80 = vld [vmem:[#allocation2 + $0x140] sm:$0xff]
    %v81 = vld [vmem:[#allocation2 + $0x148] sm:$0xff]
    %v82 = vld [vmem:[#allocation2 + $0x150] sm:$0xff]
    %v83 = vld [vmem:[#allocation2 + $0x158] sm:$0xff]
    %v84 = vld [vmem:[#allocation2 + $0x160] sm:$0xff]
    %v85 = vld [vmem:[#allocation2 + $0x168] sm:$0xff]
    %v86 = vld [vmem:[#allocation2 + $0x170] sm:$0xff]
    %v87 = vld [vmem:[#allocation2 + $0x178] sm:$0xff]
    %v88 = vld [vmem:[#allocation2 + $0x180] sm:$0xff]
    %v89 = vld [vmem:[#allocation2 + $0x188] sm:$0xff]
    %v90 = vld [vmem:[#allocation2 + $0x190] sm:$0xff]
    %v91 = vld [vmem:[#allocation2 + $0x198] sm:$0xff]
    %v92 = vld [vmem:[#allocation2 + $0x1a0] sm:$0xff]
    %v93 = vld [vmem:[#allocation2 + $0x1a8] sm:$0xff]
    %v94 = vld [vmem:[#allocation2 + $0x1b0] sm:$0xff]
    %v95 = vld [vmem:[#allocation2 + $0x1b8] sm:$0xff]
    %v96 = vld [vmem:[#allocation2 + $0x1c0] sm:$0xff]
    %v97 = vld [vmem:[#allocation2 + $0x1c8] sm:$0xff]
    %v98 = vld [vmem:[#allocation2 + $0x1d0] sm:$0xff]
    %v99 = vld [vmem:[#allocation2 + $0x1d8] sm:$0xff]
    %v100 = vld [vmem:[#allocation2 + $0x1e0] sm:$0xff]
    %v101 = vld [vmem:[#allocation2 + $0x1e8] sm:$0xff]
    %v102 = vld [vmem:[#allocation2 + $0x1f0] sm:$0xff]
    %v103 = vld [vmem:[#allocation2 + $0x1f8] sm:$0xff]
    %v104 = vld [vmem:[#allocation2 + $0x200] sm:$0xff]
    %v105 = vld [vmem:[#allocation2 + $0x208] sm:$0xff]
    %v106 = vld [vmem:[#allocation2 + $0x210] sm:$0xff]
    %v107 = vld [vmem:[#allocation2 + $0x218] sm:$0xff]
    %v108 = vld [vmem:[#allocation2 + $0x220] sm:$0xff]
    %v109 = vld [vmem:[#allocation2 + $0x228] sm:$0xff]
    %v110 = vld [vmem:[#allocation2 + $0x230] sm:$0xff]
    %v111 = vld [vmem:[#allocation2 + $0x238] sm:$0xff]
    %v112 = vld [vmem:[#allocation2 + $0x240] sm:$0xff]
    %v113 = vld [vmem:[#allocation2 + $0x248] sm:$0xff]
    %v114 = vld [vmem:[#allocation2 + $0x250] sm:$0xff]
    %v115 = vld [vmem:[#allocation2 + $0x258] sm:$0xff]
    %v116 = vld [vmem:[#allocation2 + $0x260] sm:$0xff]
    %v117 = vld [vmem:[#allocation2 + $0x268] sm:$0xff]
    %v118 = vld [vmem:[#allocation2 + $0x270] sm:$0xff]
    %v119 = vld [vmem:[#allocation2 + $0x278] sm:$0xff]
    %v120 = vld [vmem:[#allocation2 + $0x280] sm:$0xff]
    %v121 = vld [vmem:[#allocation2 + $0x288] sm:$0xff]
    %v122 = vld [vmem:[#allocation2 + $0x290] sm:$0xff]
    %v123 = vld [vmem:[#allocation2 + $0x298] sm:$0xff]
    %v124 = vld [vmem:[#allocation2 + $0x2a0] sm:$0xff]
    %v125 = vld [vmem:[#allocation2 + $0x2a8] sm:$0xff]
    %v126 = vld [vmem:[#allocation2 + $0x2b0] sm:$0xff]
    %v127 = vld [vmem:[#allocation2 + $0x2b8] sm:$0xff]
    %v128 = vld [vmem:[#allocation2 + $0x2c0] sm:$0xff]
    %v129 = vld [vmem:[#allocation2 + $0x2c8] sm:$0xff]
    %v130 = vld [vmem:[#allocation2 + $0x2d0] sm:$0xff]
    %v131 = vld [vmem:[#allocation2 + $0x2d8] sm:$0xff]
    %v132 = vld [vmem:[#allocation2 + $0x2e0] sm:$0xff]
    %v133 = vld [vmem:[#allocation2 + $0x2e8] sm:$0xff]
    %v134 = vld [vmem:[#allocation2 + $0x2f0] sm:$0xff]
    %v135 = vld [vmem:[#allocation2 + $0x2f8] sm:$0xff]
    %v136 = vld [vmem:[#allocation2 + $0x300] sm:$0xff]
    %v137 = vld [vmem:[#allocation2 + $0x308] sm:$0xff]
    %v138 = vld [vmem:[#allocation2 + $0x310] sm:$0xff]
    %v139 = vld [vmem:[#allocation2 + $0x318] sm:$0xff]
    %v140 = vld [vmem:[#allocation2 + $0x320] sm:$0xff]
    %v141 = vld [vmem:[#allocation2 + $0x328] sm:$0xff]
    %v142 = vld [vmem:[#allocation2 + $0x330] sm:$0xff]
    %v143 = vld [vmem:[#allocation2 + $0x338] sm:$0xff]
    %v144 = vld [vmem:[#allocation2 + $0x340] sm:$0xff]
    %v145 = vld [vmem:[#allocation2 + $0x348] sm:$0xff]
    %v146 = vld [vmem:[#allocation2 + $0x350] sm:$0xff]
    %v147 = vld [vmem:[#allocation2 + $0x358] sm:$0xff]
    %v148 = vld [vmem:[#allocation2 + $0x360] sm:$0xff]
    %v149 = vld [vmem:[#allocation2 + $0x368] sm:$0xff]
    %v150 = vld [vmem:[#allocation2 + $0x370] sm:$0xff]
    %v151 = vld [vmem:[#allocation2 + $0x378] sm:$0xff]
    %v152 = vld [vmem:[%s2] sm:$0x3]
    %v154 = vlaneseq
    %v155 = vshrl.u32 %v154, 7
    %v156 = vsub.s32 0, %v155
    %v157 = vrot.slane %v152, %v156
    %v158 = vlaneseq
    %v159 = vshrl.u32 %v158, 7
    %v160 = vsub.s32 1, %v159
    %v161 = vrot.slane %v152, %v160
    %v168 = vunpack.c.l.b16 %v36
    %v169 = vunpack.c.h.b16 %v36
    %v170 = vunpack.c.l.b16 %v37
    %v171 = vunpack.c.h.b16 %v37
    %v172 = vunpack.c.l.b16 %v38
    %v173 = vunpack.c.h.b16 %v38
    %v174 = vunpack.c.l.b16 %v39
    %v175 = vpack.c.b16 %v168, %v168
    %v176 = vpack.c.b16 %v169, %v169
    %v177 = vpack.c.b16 %v170, %v170
    %v178 = vpack.c.b16 %v171, %v171
    %v179 = vpack.c.b16 %v172, %v172
    %v180 = vpack.c.b16 %v173, %v173
    %v181 = vpack.c.b16 %v174, %v174
    %v301 = vunpack.c.l.b16 %v40
    %v302 = vunpack.c.h.b16 %v40
    %v303 = vunpack.c.l.b16 %v41
    %v304 = vunpack.c.h.b16 %v41
    %v305 = vunpack.c.l.b16 %v42
    %v306 = vunpack.c.h.b16 %v42
    %v307 = vunpack.c.l.b16 %v43
    %v308 = vunpack.c.h.b16 %v43
    %v309 = vunpack.c.l.b16 %v44
    %v310 = vunpack.c.h.b16 %v44
    %v311 = vunpack.c.l.b16 %v45
    %v312 = vunpack.c.h.b16 %v45
    %v313 = vunpack.c.l.b16 %v46
    %v314 = vunpack.c.h.b16 %v46
    %v315 = vunpack.c.l.b16 %v47
    %v316 = vunpack.c.h.b16 %v47
    %v317 = vunpack.c.l.b16 %v48
    %v318 = vunpack.c.h.b16 %v48
    %v319 = vunpack.c.l.b16 %v49
    %v320 = vunpack.c.h.b16 %v49
    %v321 = vunpack.c.l.b16 %v50
    %v322 = vunpack.c.h.b16 %v50
    %v323 = vunpack.c.l.b16 %v51
    %v324 = vunpack.c.h.b16 %v51
    %v325 = vunpack.c.l.b16 %v52
    %v326 = vunpack.c.h.b16 %v52
    %v327 = vunpack.c.l.b16 %v53
    %v328 = vunpack.c.h.b16 %v53
    %v329 = vunpack.c.l.b16 %v54
    %v330 = vunpack.c.h.b16 %v54
    %v331 = vunpack.c.l.b16 %v55
    %v332 = vunpack.c.h.b16 %v55
    %v333 = vunpack.c.l.b16 %v56
    %v334 = vunpack.c.h.b16 %v56
    %v335 = vunpack.c.l.b16 %v57
    %v336 = vunpack.c.h.b16 %v57
    %v337 = vunpack.c.l.b16 %v58
    %v338 = vunpack.c.h.b16 %v58
    %v339 = vunpack.c.l.b16 %v59
    %v340 = vunpack.c.h.b16 %v59
    %v341 = vunpack.c.l.b16 %v60
    %v342 = vunpack.c.h.b16 %v60
    %v343 = vunpack.c.l.b16 %v61
    %v344 = vunpack.c.h.b16 %v61
    %v345 = vunpack.c.l.b16 %v62
    %v346 = vunpack.c.h.b16 %v62
    %v347 = vunpack.c.l.b16 %v63
    %v348 = vunpack.c.h.b16 %v63
    %v349 = vunpack.c.l.b16 %v64
    %v350 = vunpack.c.h.b16 %v64
    %v351 = vunpack.c.l.b16 %v65
    %v352 = vunpack.c.h.b16 %v65
    %v353 = vunpack.c.l.b16 %v66
    %v354 = vunpack.c.h.b16 %v66
    %v355 = vunpack.c.l.b16 %v67
    %v356 = vunpack.c.h.b16 %v67
    %v357 = vunpack.c.l.b16 %v68
    %v358 = vunpack.c.h.b16 %v68
    %v359 = vunpack.c.l.b16 %v69
    %v360 = vunpack.c.h.b16 %v69
    %v361 = vunpack.c.l.b16 %v70
    %v362 = vunpack.c.h.b16 %v70
    %v363 = vunpack.c.l.b16 %v71
    %v364 = vunpack.c.h.b16 %v71
    %v365 = vunpack.c.l.b16 %v72
    %v366 = vunpack.c.h.b16 %v72
    %v367 = vunpack.c.l.b16 %v73
    %v368 = vunpack.c.h.b16 %v73
    %v369 = vunpack.c.l.b16 %v74
    %v370 = vunpack.c.h.b16 %v74
    %v371 = vunpack.c.l.b16 %v75
    %v372 = vunpack.c.h.b16 %v75
    %v373 = vunpack.c.l.b16 %v76
    %v374 = vunpack.c.h.b16 %v76
    %v375 = vunpack.c.l.b16 %v77
    %v376 = vunpack.c.h.b16 %v77
    %v377 = vunpack.c.l.b16 %v78
    %v378 = vunpack.c.h.b16 %v78
    %v379 = vunpack.c.l.b16 %v79
    %v380 = vunpack.c.h.b16 %v79
    %v381 = vunpack.c.l.b16 %v80
    %v382 = vunpack.c.h.b16 %v80
    %v383 = vunpack.c.l.b16 %v81
    %v384 = vunpack.c.h.b16 %v81
    %v385 = vunpack.c.l.b16 %v82
    %v386 = vunpack.c.h.b16 %v82
    %v387 = vunpack.c.l.b16 %v83
    %v388 = vunpack.c.h.b16 %v83
    %v389 = vunpack.c.l.b16 %v84
    %v390 = vunpack.c.h.b16 %v84
    %v391 = vunpack.c.l.b16 %v85
    %v392 = vunpack.c.h.b16 %v85
    %v393 = vunpack.c.l.b16 %v86
    %v394 = vunpack.c.h.b16 %v86
    %v395 = vunpack.c.l.b16 %v87
    %v396 = vunpack.c.h.b16 %v87
    %v397 = vunpack.c.l.b16 %v88
    %v398 = vunpack.c.h.b16 %v88
    %v399 = vunpack.c.l.b16 %v89
    %v400 = vunpack.c.h.b16 %v89
    %v401 = vunpack.c.l.b16 %v90
    %v402 = vunpack.c.h.b16 %v90
    %v403 = vunpack.c.l.b16 %v91
    %v404 = vunpack.c.h.b16 %v91
    %v405 = vunpack.c.l.b16 %v92
    %v406 = vunpack.c.h.b16 %v92
    %v407 = vunpack.c.l.b16 %v93
    %v408 = vunpack.c.h.b16 %v93
    %v409 = vunpack.c.l.b16 %v94
    %v410 = vunpack.c.h.b16 %v94
    %v411 = vunpack.c.l.b16 %v95
    %v412 = vunpack.c.h.b16 %v95
    %v413 = vunpack.c.l.b16 %v96
    %v414 = vunpack.c.h.b16 %v96
    %v415 = vunpack.c.l.b16 %v97
    %v416 = vunpack.c.h.b16 %v97
    %v417 = vunpack.c.l.b16 %v98
    %v418 = vunpack.c.h.b16 %v98
    %v419 = vunpack.c.l.b16 %v99
    %v420 = vunpack.c.h.b16 %v99
    %v421 = vunpack.c.l.b16 %v100
    %v422 = vunpack.c.h.b16 %v100
    %v423 = vunpack.c.l.b16 %v101
    %v424 = vunpack.c.h.b16 %v101
    %v425 = vunpack.c.l.b16 %v102
    %v426 = vunpack.c.h.b16 %v102
    %v427 = vunpack.c.l.b16 %v103
    %v428 = vunpack.c.h.b16 %v103
    %v429 = vunpack.c.l.b16 %v104
    %v430 = vunpack.c.h.b16 %v104
    %v431 = vunpack.c.l.b16 %v105
    %v432 = vunpack.c.h.b16 %v105
    %v433 = vunpack.c.l.b16 %v106
    %v434 = vunpack.c.h.b16 %v106
    %v435 = vunpack.c.l.b16 %v107
    %v436 = vunpack.c.h.b16 %v107
    %v437 = vunpack.c.l.b16 %v108
    %v438 = vunpack.c.h.b16 %v108
    %v439 = vunpack.c.l.b16 %v109
    %v440 = vunpack.c.h.b16 %v109
    %v441 = vunpack.c.l.b16 %v110
    %v442 = vunpack.c.h.b16 %v110
    %v443 = vunpack.c.l.b16 %v111
    %v444 = vunpack.c.h.b16 %v111
    %v445 = vunpack.c.l.b16 %v112
    %v446 = vunpack.c.h.b16 %v112
    %v447 = vunpack.c.l.b16 %v113
    %v448 = vunpack.c.h.b16 %v113
    %v449 = vunpack.c.l.b16 %v114
    %v450 = vunpack.c.h.b16 %v114
    %v451 = vunpack.c.l.b16 %v115
    %v452 = vunpack.c.h.b16 %v115
    %v453 = vunpack.c.l.b16 %v116
    %v454 = vunpack.c.h.b16 %v116
    %v455 = vunpack.c.l.b16 %v117
    %v456 = vunpack.c.h.b16 %v117
    %v457 = vunpack.c.l.b16 %v118
    %v458 = vunpack.c.h.b16 %v118
    %v459 = vunpack.c.l.b16 %v119
    %v460 = vunpack.c.h.b16 %v119
    %v461 = vunpack.c.l.b16 %v120
    %v462 = vunpack.c.h.b16 %v120
    %v463 = vunpack.c.l.b16 %v121
    %v464 = vunpack.c.h.b16 %v121
    %v465 = vunpack.c.l.b16 %v122
    %v466 = vunpack.c.h.b16 %v122
    %v467 = vunpack.c.l.b16 %v123
    %v468 = vunpack.c.h.b16 %v123
    %v469 = vunpack.c.l.b16 %v124
    %v470 = vunpack.c.h.b16 %v124
    %v471 = vunpack.c.l.b16 %v125
    %v472 = vunpack.c.h.b16 %v125
    %v473 = vunpack.c.l.b16 %v126
    %v474 = vunpack.c.h.b16 %v126
    %v475 = vunpack.c.l.b16 %v127
    %v476 = vunpack.c.h.b16 %v127
    %v477 = vunpack.c.l.b16 %v128
    %v478 = vunpack.c.h.b16 %v128
    %v479 = vunpack.c.l.b16 %v129
    %v480 = vunpack.c.h.b16 %v129
    %v481 = vunpack.c.l.b16 %v130
    %v482 = vunpack.c.h.b16 %v130
    %v483 = vunpack.c.l.b16 %v131
    %v484 = vunpack.c.h.b16 %v131
    %v485 = vunpack.c.l.b16 %v132
    %v486 = vunpack.c.h.b16 %v132
    %v487 = vunpack.c.l.b16 %v133
    %v488 = vunpack.c.h.b16 %v133
    %v489 = vunpack.c.l.b16 %v134
    %v490 = vunpack.c.h.b16 %v134
    %v491 = vunpack.c.l.b16 %v135
    %v492 = vunpack.c.h.b16 %v135
    %v493 = vunpack.c.l.b16 %v136
    %v494 = vunpack.c.h.b16 %v136
    %v495 = vunpack.c.l.b16 %v137
    %v496 = vunpack.c.h.b16 %v137
    %v497 = vunpack.c.l.b16 %v138
    %v498 = vunpack.c.h.b16 %v138
    %v499 = vunpack.c.l.b16 %v139
    %v500 = vunpack.c.h.b16 %v139
    %v501 = vunpack.c.l.b16 %v140
    %v502 = vunpack.c.h.b16 %v140
    %v503 = vunpack.c.l.b16 %v141
    %v504 = vunpack.c.h.b16 %v141
    %v505 = vunpack.c.l.b16 %v142
    %v506 = vunpack.c.h.b16 %v142
    %v507 = vunpack.c.l.b16 %v143
    %v508 = vunpack.c.h.b16 %v143
    %v509 = vunpack.c.l.b16 %v144
    %v510 = vunpack.c.h.b16 %v144
    %v511 = vunpack.c.l.b16 %v145
    %v512 = vunpack.c.h.b16 %v145
    %v513 = vunpack.c.l.b16 %v146
    %v514 = vunpack.c.h.b16 %v146
    %v515 = vunpack.c.l.b16 %v147
    %v516 = vunpack.c.h.b16 %v147
    %v517 = vunpack.c.l.b16 %v148
    %v518 = vunpack.c.h.b16 %v148
    %v519 = vunpack.c.l.b16 %v149
    %v520 = vunpack.c.h.b16 %v149
    %v521 = vunpack.c.l.b16 %v150
    %v522 = vunpack.c.h.b16 %v150
    %v523 = vunpack.c.l.b16 %v151
    %v524 = vunpack.c.h.b16 %v151
    %v525 = vpack.c.b16 %v303, %v301
    %v526 = vpack.c.b16 %v304, %v302
    %v527 = vpack.c.b16 %v307, %v305
    %v528 = vpack.c.b16 %v308, %v306
    %v529 = vpack.c.b16 %v311, %v309
    %v530 = vpack.c.b16 %v312, %v310
    %v531 = vpack.c.b16 %v315, %v313
    %v532 = vpack.c.b16 %v316, %v314
    %v533 = vpack.c.b16 %v319, %v317
    %v534 = vpack.c.b16 %v320, %v318
    %v535 = vpack.c.b16 %v323, %v321
    %v536 = vpack.c.b16 %v324, %v322
    %v537 = vpack.c.b16 %v327, %v325
    %v538 = vpack.c.b16 %v328, %v326
    %v539 = vpack.c.b16 %v331, %v329
    %v540 = vpack.c.b16 %v332, %v330
    %v541 = vpack.c.b16 %v335, %v333
    %v542 = vpack.c.b16 %v336, %v334
    %v543 = vpack.c.b16 %v339, %v337
    %v544 = vpack.c.b16 %v340, %v338
    %v545 = vpack.c.b16 %v343, %v341
    %v546 = vpack.c.b16 %v344, %v342
    %v547 = vpack.c.b16 %v347, %v345
    %v548 = vpack.c.b16 %v348, %v346
    %v549 = vpack.c.b16 %v351, %v349
    %v550 = vpack.c.b16 %v352, %v350
    %v551 = vpack.c.b16 %v355, %v353
    %v552 = vpack.c.b16 %v356, %v354
    %v553 = vpack.c.b16 %v359, %v357
    %v554 = vpack.c.b16 %v360, %v358
    %v555 = vpack.c.b16 %v363, %v361
    %v556 = vpack.c.b16 %v364, %v362
    %v557 = vpack.c.b16 %v367, %v365
    %v558 = vpack.c.b16 %v368, %v366
    %v559 = vpack.c.b16 %v371, %v369
    %v560 = vpack.c.b16 %v372, %v370
    %v561 = vpack.c.b16 %v375, %v373
    %v562 = vpack.c.b16 %v376, %v374
    %v563 = vpack.c.b16 %v379, %v377
    %v564 = vpack.c.b16 %v380, %v378
    %v565 = vpack.c.b16 %v383, %v381
    %v566 = vpack.c.b16 %v384, %v382
    %v567 = vpack.c.b16 %v387, %v385
    %v568 = vpack.c.b16 %v388, %v386
    %v569 = vpack.c.b16 %v391, %v389
    %v570 = vpack.c.b16 %v392, %v390
    %v571 = vpack.c.b16 %v395, %v393
    %v572 = vpack.c.b16 %v396, %v394
    %v573 = vpack.c.b16 %v399, %v397
    %v574 = vpack.c.b16 %v400, %v398
    %v575 = vpack.c.b16 %v403, %v401
    %v576 = vpack.c.b16 %v404, %v402
    %v577 = vpack.c.b16 %v407, %v405
    %v578 = vpack.c.b16 %v408, %v406
    %v579 = vpack.c.b16 %v411, %v409
    %v580 = vpack.c.b16 %v412, %v410
    %v581 = vpack.c.b16 %v415, %v413
    %v582 = vpack.c.b16 %v416, %v414
    %v583 = vpack.c.b16 %v419, %v417
    %v584 = vpack.c.b16 %v420, %v418
    %v585 = vpack.c.b16 %v423, %v421
    %v586 = vpack.c.b16 %v424, %v422
    %v587 = vpack.c.b16 %v427, %v425
    %v588 = vpack.c.b16 %v428, %v426
    %v589 = vpack.c.b16 %v431, %v429
    %v590 = vpack.c.b16 %v432, %v430
    %v591 = vpack.c.b16 %v435, %v433
    %v592 = vpack.c.b16 %v436, %v434
    %v593 = vpack.c.b16 %v439, %v437
    %v594 = vpack.c.b16 %v440, %v438
    %v595 = vpack.c.b16 %v443, %v441
    %v596 = vpack.c.b16 %v444, %v442
    %v597 = vpack.c.b16 %v447, %v445
    %v598 = vpack.c.b16 %v448, %v446
    %v599 = vpack.c.b16 %v451, %v449
    %v600 = vpack.c.b16 %v452, %v450
    %v601 = vpack.c.b16 %v455, %v453
    %v602 = vpack.c.b16 %v456, %v454
    %v603 = vpack.c.b16 %v459, %v457
    %v604 = vpack.c.b16 %v460, %v458
    %v605 = vpack.c.b16 %v463, %v461
    %v606 = vpack.c.b16 %v464, %v462
    %v607 = vpack.c.b16 %v467, %v465
    %v608 = vpack.c.b16 %v468, %v466
    %v609 = vpack.c.b16 %v471, %v469
    %v610 = vpack.c.b16 %v472, %v470
    %v611 = vpack.c.b16 %v475, %v473
    %v612 = vpack.c.b16 %v476, %v474
    %v613 = vpack.c.b16 %v479, %v477
    %v614 = vpack.c.b16 %v480, %v478
    %v615 = vpack.c.b16 %v483, %v481
    %v616 = vpack.c.b16 %v484, %v482
    %v617 = vpack.c.b16 %v487, %v485
    %v618 = vpack.c.b16 %v488, %v486
    %v619 = vpack.c.b16 %v491, %v489
    %v620 = vpack.c.b16 %v492, %v490
    %v621 = vpack.c.b16 %v495, %v493
    %v622 = vpack.c.b16 %v496, %v494
    %v623 = vpack.c.b16 %v499, %v497
    %v624 = vpack.c.b16 %v500, %v498
    %v625 = vpack.c.b16 %v503, %v501
    %v626 = vpack.c.b16 %v504, %v502
    %v627 = vpack.c.b16 %v507, %v505
    %v628 = vpack.c.b16 %v508, %v506
    %v629 = vpack.c.b16 %v511, %v509
    %v630 = vpack.c.b16 %v512, %v510
    %v631 = vpack.c.b16 %v515, %v513
    %v632 = vpack.c.b16 %v516, %v514
    %v633 = vpack.c.b16 %v519, %v517
    %v634 = vpack.c.b16 %v520, %v518
    %v635 = vpack.c.b16 %v523, %v521
    %v636 = vpack.c.b16 %v524, %v522
    %749 = vmatprep.subr.bf16.mxu0 %v526
    %750 = vmatpush1.bf16.msra.mxu0 %v525
    %751 = vmatprep.subr.bf16.mxu0 %v528
    %752 = vmatpush1.bf16.msra.mxu0 %v527
    %753 = vmatprep.subr.bf16.mxu0 %v530
    %754 = vmatpush1.bf16.msra.mxu0 %v529
    %755 = vmatprep.subr.bf16.mxu0 %v532
    %756 = vmatpush1.bf16.msra.mxu0 %v531
    %757 = vmatprep.subr.bf16.mxu0 %v534
    %758 = vmatpush1.bf16.msra.mxu0 %v533
    %759 = vmatprep.subr.bf16.mxu0 %v536
    %760 = vmatpush1.bf16.msra.mxu0 %v535
    %761 = vmatprep.subr.bf16.mxu0 %v538
    %762 = vmatpush1.bf16.msra.mxu0 %v537
    %763 = vmatprep.subr.bf16.mxu0 %v540
    %764 = vmatpush1.bf16.msra.mxu0 %v539
    %765 = vmatprep.subr.bf16.mxu0 %v542
    %766 = vmatpush1.bf16.msra.mxu0 %v541
    %767 = vmatprep.subr.bf16.mxu0 %v544
    %768 = vmatpush1.bf16.msra.mxu0 %v543
    %769 = vmatprep.subr.bf16.mxu0 %v546
    %770 = vmatpush1.bf16.msra.mxu0 %v545
    %771 = vmatprep.subr.bf16.mxu0 %v548
    %772 = vmatpush1.bf16.msra.mxu0 %v547
    %773 = vmatprep.subr.bf16.mxu0 %v550
    %774 = vmatpush1.bf16.msra.mxu0 %v549
    %775 = vmatprep.subr.bf16.mxu0 %v552
    %776 = vmatpush1.bf16.msra.mxu0 %v551
    %777 = vmatprep.subr.bf16.mxu0 %v554
    %778 = vmatpush1.bf16.msra.mxu0 %v553
    %779 = vmatprep.subr.bf16.mxu0 %v556
    %780 = vmatpush1.bf16.msra.mxu0 %v555
    %781 = vmatprep.mubr.bf16.mxu0 %v176
    %782 = vmatmul.mubr.bf16.gmra.mrb[0].mxu0 %v175
    %v783 = vpop.f32.mrb[0].mxu0
    %v784 = vadd.f32 %v157, %v783
    %v785 = vpop.f32.mrb[0].mxu0
    %v786 = vadd.f32 %v161, %v785
    %v787 = vpop.f32.mrb[0].mxu0
    %v788 = vpop.f32.mrb[0].mxu0
    %789 = vdwg.mxu0
    %790 = vmatprep.subr.bf16.mxu0 %v558
    %791 = vmatpush1.bf16.msra.mxu0 %v557
    %792 = vmatprep.subr.bf16.mxu0 %v560
    %793 = vmatpush1.bf16.msra.mxu0 %v559
    %794 = vmatprep.subr.bf16.mxu0 %v562
    %795 = vmatpush1.bf16.msra.mxu0 %v561
    %796 = vmatprep.subr.bf16.mxu0 %v564
    %797 = vmatpush1.bf16.msra.mxu0 %v563
    %798 = vmatprep.subr.bf16.mxu0 %v566
    %799 = vmatpush1.bf16.msra.mxu0 %v565
    %800 = vmatprep.subr.bf16.mxu0 %v568
    %801 = vmatpush1.bf16.msra.mxu0 %v567
    %802 = vmatprep.subr.bf16.mxu0 %v570
    %803 = vmatpush1.bf16.msra.mxu0 %v569
    %804 = vmatprep.subr.bf16.mxu0 %v572
    %805 = vmatpush1.bf16.msra.mxu0 %v571
    %806 = vmatprep.subr.bf16.mxu0 %v574
    %807 = vmatpush1.bf16.msra.mxu0 %v573
    %808 = vmatprep.subr.bf16.mxu0 %v576
    %809 = vmatpush1.bf16.msra.mxu0 %v575
    %810 = vmatprep.subr.bf16.mxu0 %v578
    %811 = vmatpush1.bf16.msra.mxu0 %v577
    %812 = vmatprep.subr.bf16.mxu0 %v580
    %813 = vmatpush1.bf16.msra.mxu0 %v579
    %814 = vmatprep.subr.bf16.mxu0 %v582
    %815 = vmatpush1.bf16.msra.mxu0 %v581
    %816 = vmatprep.subr.bf16.mxu0 %v584
    %817 = vmatpush1.bf16.msra.mxu0 %v583
    %818 = vmatprep.subr.bf16.mxu0 %v586
    %819 = vmatpush1.bf16.msra.mxu0 %v585
    %820 = vmatprep.subr.bf16.mxu0 %v588
    %821 = vmatpush1.bf16.msra.mxu0 %v587
    %822 = vmatprep.mubr.bf16.mxu0 %v178
    %823 = vmatmul.mubr.bf16.gmra.mrb[0].mxu0 %v177
    %v824 = vpop.f32.mrb[0].mxu0
    %v825 = vadd.f32 %v784, %v824
    %v826 = vpop.f32.mrb[0].mxu0
    %v827 = vadd.f32 %v786, %v826
    %v828 = vpop.f32.mrb[0].mxu0
    %v829 = vpop.f32.mrb[0].mxu0
    %830 = vdwg.mxu0
    %831 = vmatprep.subr.bf16.mxu0 %v590
    %832 = vmatpush1.bf16.msra.mxu0 %v589
    %833 = vmatprep.subr.bf16.mxu0 %v592
    %834 = vmatpush1.bf16.msra.mxu0 %v591
    %835 = vmatprep.subr.bf16.mxu0 %v594
    %836 = vmatpush1.bf16.msra.mxu0 %v593
    %837 = vmatprep.subr.bf16.mxu0 %v596
    %838 = vmatpush1.bf16.msra.mxu0 %v595
    %839 = vmatprep.subr.bf16.mxu0 %v598
    %840 = vmatpush1.bf16.msra.mxu0 %v597
    %841 = vmatprep.subr.bf16.mxu0 %v600
    %842 = vmatpush1.bf16.msra.mxu0 %v599
    %843 = vmatprep.subr.bf16.mxu0 %v602
    %844 = vmatpush1.bf16.msra.mxu0 %v601
    %845 = vmatprep.subr.bf16.mxu0 %v604
    %846 = vmatpush1.bf16.msra.mxu0 %v603
    %847 = vmatprep.subr.bf16.mxu0 %v606
    %848 = vmatpush1.bf16.msra.mxu0 %v605
    %849 = vmatprep.subr.bf16.mxu0 %v608
    %850 = vmatpush1.bf16.msra.mxu0 %v607
    %851 = vmatprep.subr.bf16.mxu0 %v610
    %852 = vmatpush1.bf16.msra.mxu0 %v609
    %853 = vmatprep.subr.bf16.mxu0 %v612
    %854 = vmatpush1.bf16.msra.mxu0 %v611
    %855 = vmatprep.subr.bf16.mxu0 %v614
    %856 = vmatpush1.bf16.msra.mxu0 %v613
    %857 = vmatprep.subr.bf16.mxu0 %v616
    %858 = vmatpush1.bf16.msra.mxu0 %v615
    %859 = vmatprep.subr.bf16.mxu0 %v618
    %860 = vmatpush1.bf16.msra.mxu0 %v617
    %861 = vmatprep.subr.bf16.mxu0 %v620
    %862 = vmatpush1.bf16.msra.mxu0 %v619
    %863 = vmatprep.mubr.bf16.mxu0 %v180
    %864 = vmatmul.mubr.bf16.gmra.mrb[0].mxu0 %v179
    %v865 = vpop.f32.mrb[0].mxu0
    %v866 = vadd.f32 %v825, %v865
    %v867 = vpop.f32.mrb[0].mxu0
    %v868 = vadd.f32 %v827, %v867
    %v869 = vpop.f32.mrb[0].mxu0
    %v870 = vpop.f32.mrb[0].mxu0
    %871 = vdwg.mxu0
    %872 = vmatprep.subr.bf16.mxu0 %v622
    %873 = vmatpush1.bf16.msra.mxu0 %v621
    %874 = vmatprep.subr.bf16.mxu0 %v624
    %875 = vmatpush1.bf16.msra.mxu0 %v623
    %876 = vmatprep.subr.bf16.mxu0 %v626
    %877 = vmatpush1.bf16.msra.mxu0 %v625
    %878 = vmatprep.subr.bf16.mxu0 %v628
    %879 = vmatpush1.bf16.msra.mxu0 %v627
    %880 = vmatprep.subr.bf16.mxu0 %v630
    %881 = vmatpush1.bf16.msra.mxu0 %v629
    %882 = vmatprep.subr.bf16.mxu0 %v632
    %883 = vmatpush1.bf16.msra.mxu0 %v631
    %884 = vmatprep.subr.bf16.mxu0 %v634
    %885 = vmatpush1.bf16.msra.mxu0 %v633
    %886 = vmatprep.subr.bf16.mxu0 %v636
    %887 = vmatpush1.bf16.msra.mxu0 %v635
    %888 = vmatprep.subr.bf16.mxu0 0
    %889 = vmatpush1.bf16.msra.mxu0 0
    %890 = vmatprep.subr.bf16.mxu0 0
    %891 = vmatpush1.bf16.msra.mxu0 0
    %892 = vmatprep.subr.bf16.mxu0 0
    %893 = vmatpush1.bf16.msra.mxu0 0
    %894 = vmatprep.subr.bf16.mxu0 0
    %895 = vmatpush1.bf16.msra.mxu0 0
    %896 = vmatprep.subr.bf16.mxu0 0
    %897 = vmatpush1.bf16.msra.mxu0 0
    %898 = vmatprep.subr.bf16.mxu0 0
    %899 = vmatpush1.bf16.msra.mxu0 0
    %900 = vmatprep.subr.bf16.mxu0 0
    %901 = vmatpush1.bf16.msra.mxu0 0
    %902 = vmatprep.subr.bf16.mxu0 0
    %903 = vmatpush1.bf16.msra.mxu0 0
    %904 = vmatprep.mubr.bf16.mxu0 0
    %905 = vmatmul.mubr.bf16.gmra.mrb[0].mxu0 %v181
    %v906 = vpop.f32.mrb[0].mxu0
    %v907 = vadd.f32 %v866, %v906
    %v908 = vpop.f32.mrb[0].mxu0
    %v909 = vadd.f32 %v868, %v908
    %v910 = vpop.f32.mrb[0].mxu0
    %v911 = vpop.f32.mrb[0].mxu0
    %912 = vdwg.mxu0
    %v913 = vmax.f32 %v907, 0.0
    %v914 = vmax.f32 %v909, 0.0
    %v915 = vpack.c.bf16 %v913, %v913
    %v916 = vpack.c.bf16 %v914, %v914
    %v917 = vld [vmem:[%s3] sm:$0xf]
    %v918 = vld [vmem:[%s3 + $0x4] sm:$0xf]
    %v919 = vld [vmem:[%s3 + $0x8] sm:$0xf]
    %v920 = vld [vmem:[%s3 + $0xc] sm:$0xf]
    %v921 = vld [vmem:[%s3 + $0x10] sm:$0xf]
    %v922 = vld [vmem:[%s3 + $0x14] sm:$0xf]
    %v923 = vld [vmem:[%s3 + $0x18] sm:$0xf]
    %v924 = vld [vmem:[%s3 + $0x1c] sm:$0xf]
    %v925 = vld [vmem:[%s3 + $0x20] sm:$0xf]
    %v926 = vld [vmem:[%s3 + $0x24] sm:$0xf]
    %v927 = vld [vmem:[%s3 + $0x28] sm:$0xf]
    %v928 = vld [vmem:[%s3 + $0x2c] sm:$0xf]
    %v929 = vld [vmem:[%s3 + $0x30] sm:$0xf]
    %v930 = vld [vmem:[%s3 + $0x34] sm:$0xf]
    %v931 = vld [vmem:[%s3 + $0x38] sm:$0xf]
    %v932 = vld [vmem:[%s3 + $0x3c] sm:$0xf]
    %v933 = vld [vmem:[%s3 + $0x40] sm:$0xf]
    %v934 = vld [vmem:[%s3 + $0x44] sm:$0xf]
    %v935 = vld [vmem:[%s3 + $0x48] sm:$0xf]
    %v936 = vld [vmem:[%s3 + $0x4c] sm:$0xf]
    %v937 = vld [vmem:[%s3 + $0x50] sm:$0xf]
    %v938 = vld [vmem:[%s3 + $0x54] sm:$0xf]
    %v939 = vld [vmem:[%s3 + $0x58] sm:$0xf]
    %v940 = vld [vmem:[%s3 + $0x5c] sm:$0xf]
    %v941 = vld [vmem:[%s3 + $0x60] sm:$0xf]
    %v942 = vld [vmem:[%s3 + $0x64] sm:$0xf]
    %v943 = vld [vmem:[%s3 + $0x68] sm:$0xf]
    %v944 = vld [vmem:[%s3 + $0x6c] sm:$0xf]
    %v945 = vld [vmem:[%s3 + $0x70] sm:$0xf]
    %v946 = vld [vmem:[%s3 + $0x74] sm:$0xf]
    %v947 = vld [vmem:[%s3 + $0x78] sm:$0xf]
    %v948 = vld [vmem:[%s3 + $0x7c] sm:$0xf]
    %v949 = vld [vmem:[%s4] sm:$0x1]
    %v951 = vlaneseq
    %v952 = vshrl.u32 %v951, 7
    %v953 = vsub.s32 0, %v952
    %v954 = vrot.slane %v949, %v953
    %v988 = vunpack.c.l.b16 %v917
    %v989 = vunpack.c.l.b16 %v918
    %v990 = vunpack.c.l.b16 %v919
    %v991 = vunpack.c.l.b16 %v920
    %v992 = vunpack.c.l.b16 %v921
    %v993 = vunpack.c.l.b16 %v922
    %v994 = vunpack.c.l.b16 %v923
    %v995 = vunpack.c.l.b16 %v924
    %v996 = vunpack.c.l.b16 %v925
    %v997 = vunpack.c.l.b16 %v926
    %v998 = vunpack.c.l.b16 %v927
    %v999 = vunpack.c.l.b16 %v928
    %v1000 = vunpack.c.l.b16 %v929
    %v1001 = vunpack.c.l.b16 %v930
    %v1002 = vunpack.c.l.b16 %v931
    %v1003 = vunpack.c.l.b16 %v932
    %v1004 = vunpack.c.l.b16 %v933
    %v1005 = vunpack.c.l.b16 %v934
    %v1006 = vunpack.c.l.b16 %v935
    %v1007 = vunpack.c.l.b16 %v936
    %v1008 = vunpack.c.l.b16 %v937
    %v1009 = vunpack.c.l.b16 %v938
    %v1010 = vunpack.c.l.b16 %v939
    %v1011 = vunpack.c.l.b16 %v940
    %v1012 = vunpack.c.l.b16 %v941
    %v1013 = vunpack.c.l.b16 %v942
    %v1014 = vunpack.c.l.b16 %v943
    %v1015 = vunpack.c.l.b16 %v944
    %v1016 = vunpack.c.l.b16 %v945
    %v1017 = vunpack.c.l.b16 %v946
    %v1018 = vunpack.c.l.b16 %v947
    %v1019 = vunpack.c.l.b16 %v948
    %v1020 = vpack.c.b16 %v989, %v988
    %v1021 = vpack.c.b16 %v991, %v990
    %v1022 = vpack.c.b16 %v993, %v992
    %v1023 = vpack.c.b16 %v995, %v994
    %v1024 = vpack.c.b16 %v997, %v996
    %v1025 = vpack.c.b16 %v999, %v998
    %v1026 = vpack.c.b16 %v1001, %v1000
    %v1027 = vpack.c.b16 %v1003, %v1002
    %v1028 = vpack.c.b16 %v1005, %v1004
    %v1029 = vpack.c.b16 %v1007, %v1006
    %v1030 = vpack.c.b16 %v1009, %v1008
    %v1031 = vpack.c.b16 %v1011, %v1010
    %v1032 = vpack.c.b16 %v1013, %v1012
    %v1033 = vpack.c.b16 %v1015, %v1014
    %v1034 = vpack.c.b16 %v1017, %v1016
    %v1035 = vpack.c.b16 %v1019, %v1018
    %1052 = vmatprep.subr.bf16.mxu0 0
    %1053 = vmatpush1.bf16.msra.mxu0 %v1020
    %1054 = vmatprep.subr.bf16.mxu0 0
    %1055 = vmatpush1.bf16.msra.mxu0 %v1021
    %1056 = vmatprep.subr.bf16.mxu0 0
    %1057 = vmatpush1.bf16.msra.mxu0 %v1022
    %1058 = vmatprep.subr.bf16.mxu0 0
    %1059 = vmatpush1.bf16.msra.mxu0 %v1023
    %1060 = vmatprep.subr.bf16.mxu0 0
    %1061 = vmatpush1.bf16.msra.mxu0 %v1024
    %1062 = vmatprep.subr.bf16.mxu0 0
    %1063 = vmatpush1.bf16.msra.mxu0 %v1025
    %1064 = vmatprep.subr.bf16.mxu0 0
    %1065 = vmatpush1.bf16.msra.mxu0 %v1026
    %1066 = vmatprep.subr.bf16.mxu0 0
    %1067 = vmatpush1.bf16.msra.mxu0 %v1027
    %1068 = vmatprep.subr.bf16.mxu0 0
    %1069 = vmatpush1.bf16.msra.mxu0 %v1028
    %1070 = vmatprep.subr.bf16.mxu0 0
    %1071 = vmatpush1.bf16.msra.mxu0 %v1029
    %1072 = vmatprep.subr.bf16.mxu0 0
    %1073 = vmatpush1.bf16.msra.mxu0 %v1030
    %1074 = vmatprep.subr.bf16.mxu0 0
    %1075 = vmatpush1.bf16.msra.mxu0 %v1031
    %1076 = vmatprep.subr.bf16.mxu0 0
    %1077 = vmatpush1.bf16.msra.mxu0 %v1032
    %1078 = vmatprep.subr.bf16.mxu0 0
    %1079 = vmatpush1.bf16.msra.mxu0 %v1033
    %1080 = vmatprep.subr.bf16.mxu0 0
    %1081 = vmatpush1.bf16.msra.mxu0 %v1034
    %1082 = vmatprep.subr.bf16.mxu0 0
    %1083 = vmatpush1.bf16.msra.mxu0 %v1035
    %1084 = vmatprep.mubr.bf16.mxu0 %v916
    %1085 = vmatmul.mubr.bf16.gmra.mrb[0].mxu0 %v915
    %v1086 = vpop.f32.mrb[0].mxu0
    %v1087 = vadd.f32 %v954, %v1086
    %v1088 = vpop.f32.mrb[0].mxu0
    %v1089 = vpop.f32.mrb[0].mxu0
    %v1090 = vpop.f32.mrb[0].mxu0
    %1091 = vdwg.mxu0
    %1092 = vst [vmem:[#allocation5] sm:$0xff] %v1087
    // Predicated region
    $region26: #{mlp_forward.1} parent=1 // pred_check
      _
    $region27: #{mlp_forward.1} parent=1 // pred_check_branch
      %1094 = sbr.rel (0) target = $region29
    $region28: #{mlp_forward.1} parent=1 // pred_region
      %s1096 = ssub.s32 128, 128
      %1097 = vsyncadd [#allocation4], %s1096
      %s1099 = sshll.u32 [#allocation5], 4
      %s1100 = int_to_ptr.vmem [resolvable:$true] %s1099
      %1102 = dma.vmem_to_hbm [thread:$0]  %s1100, 128, %s5, [#allocation4]
    $region29: #{mlp_forward.1} parent=1 // pred_fallthru
      _
    // Predicated region
    $region30: #{mlp_forward.1} parent=1 // pred_check
      _
    $region31: #{mlp_forward.1} parent=1 // pred_check_branch
      %1104 = sbr.rel (0) target = $region33
    $region32: #{mlp_forward.1} parent=1 // pred_region
      %1105 = dma.done [#allocation4], 128
    $region33: #{mlp_forward.1} parent=1 // pred_fallthru
      _
    %1106 = vsyncpa [#allocation3], 1
    %1107 = vsyncpa [#allocation4], 1

</llo_original>
